<compile_context>
chip_gen: v6e
topology: v6e:2x2x1
jax: 0.10.0
libtpu: 0.0.40
codegen_flags: <defaults>
</compile_context>

<pallas_src>
import jax
import jax.numpy as jnp
from jax.experimental import pallas as pl
from jax.experimental.pallas import tpu as pltpu

# Quantization parameters from the module's forward().
X_SCALE, X_ZP = 0.0215, -25
Y_SCALE, Y_ZP = 0.0176, 18
COMBINED_SCALE = X_SCALE * Y_SCALE


def mm_qint8_int8_mxu_kernel(x_ref, y_ref, o_ref):
    """int8 MXU path (v5e/v6e): integer matmul + zero-point correction."""
    x_i8 = x_ref[...]
    y_i8 = y_ref[...]
    k = x_i8.shape[1]

    # int8 x int8 -> int32 accumulate on the MXU (native rate on v5e/v6e).
    acc = jnp.dot(x_i8, y_i8, preferred_element_type=jnp.int32)

    # Rank-1 zero-point corrections, all in int32 (no overflow for any K here).
    x_i32 = x_i8.astype(jnp.int32)
    y_i32 = y_i8.astype(jnp.int32)
    row_sum = jnp.sum(x_i32, axis=1, keepdims=True)   # [M, 1]  (lane reduce)
    col_sum = jnp.sum(y_i32, axis=0, keepdims=True)   # [1, N]  (sublane reduce)
    corrected = acc - Y_ZP * row_sum - X_ZP * col_sum + (k * X_ZP * Y_ZP)

    # Single combined scale on the O(M*N) output.
    o_ref[...] = corrected.astype(jnp.float32) * jnp.float32(COMBINED_SCALE)


def mm_qint8_bf16_mxu_kernel(x_ref, y_ref, o_ref):
    """bf16 MXU path (v7x): exact integer intermediates in bf16.

    int8 values and (x - zp) with |x - zp| <= 255 are exactly representable
    in bf16, so a direct int8 -> bf16 cast + bf16 zero-point subtraction is
    exact and uses one VPU pass per operand.
    """
    x_c = x_ref[...].astype(jnp.bfloat16) - jnp.bfloat16(X_ZP)
    y_c = y_ref[...].astype(jnp.bfloat16) - jnp.bfloat16(Y_ZP)
    acc = jnp.dot(x_c, y_c, preferred_element_type=jnp.float32)
    o_ref[...] = acc * jnp.float32(COMBINED_SCALE)


def _call_pallas(kernel, x: jax.Array, y: jax.Array) -> jax.Array:
    M, K = x.shape
    K2, N = y.shape
    assert K == K2
    return pl.pallas_call(
        kernel,
        out_shape=jax.ShapeDtypeStruct((M, N), jnp.float32),
        # Whole problem fits in one tile: full-array VMEM blocks, no grid,
        # no index_map plumbing.
        in_specs=[
            pl.BlockSpec(memory_space=pltpu.MemorySpace.VMEM),
            pl.BlockSpec(memory_space=pltpu.MemorySpace.VMEM),
        ],
        out_specs=pl.BlockSpec(memory_space=pltpu.MemorySpace.VMEM),
        cost_estimate=pl.CostEstimate(
            flops=2 * M * N * K + M * N,
            transcendentals=0,
            bytes_accessed=M * K + K * N + 4 * M * N,
        ),
    )(x, y)


def _mxu_has_int8() -> bool:
    """True on chips whose MXU has an integer mode (v5e/v6e); False on v7x.

    Computed once at import. Defaults to the int8 path unless the device kind
    clearly identifies a v7-class chip (whose MXU has no integer mode).
    """
    try:
        kind = jax.devices()[0].device_kind.lower()
    except Exception:
        # No devices visible at import; assume the common int8-capable case.
        return True
    return not ("v7" in kind or "tpu7" in kind or "7x" in kind)


# Static, one-time kernel selection (trace-time constant under jit).
_USE_INT8_MXU = _mxu_has_int8()


@jax.jit
def aten_mm_qint8(x: jax.Array, y: jax.Array) -> jax.Array:
    kernel = mm_qint8_int8_mxu_kernel if _USE_INT8_MXU else mm_qint8_bf16_mxu_kernel
    return _call_pallas(kernel, x, y)


def reference(x: jax.Array, y: jax.Array) -> jax.Array:
    x_f = (x.astype(jnp.float32) - X_ZP) * X_SCALE
    y_f = (y.astype(jnp.float32) - Y_ZP) * Y_SCALE
    return x_f @ y_f


if __name__ == "__main__":
    key = jax.random.PRNGKey(0)
    kx, ky = jax.random.split(key)
    # int8 inputs in the valid quantized range [-128, 127].
    x = jax.random.randint(kx, (3, 4), -128, 128, dtype=jnp.int32).astype(jnp.int8)
    y = jax.random.randint(ky, (4, 3), -128, 128, dtype=jnp.int32).astype(jnp.int8)

    z = aten_mm_qint8(x, y)
    jax.block_until_ready(z)

    z_ref = reference(x, y)
    assert z.shape == (3, 3) and z.dtype == jnp.float32
    assert jnp.allclose(z, z_ref, rtol=1e-5, atol=1e-4), (z, z_ref)

    print("KERNEL_OK")
</pallas_src>

<mosaic_0001>
module attributes {stable_mosaic.version = 11 : i64} {
  func.func @mm_qint8_int8_mxu_kernel(%arg0: memref<3x4xi8, #tpu.memory_space<vmem>>, %arg1: memref<4x3xi8, #tpu.memory_space<vmem>>, %arg2: memref<3x3xf32, #tpu.memory_space<vmem>>) attributes {dimension_semantics = [], scalar_prefetch = 0 : i64, scratch_operands = 0 : i64, tpu.core_type = #tpu.core_type<tc>} {
    %c0 = arith.constant 0 : index
    %c0_0 = arith.constant 0 : index
    %0 = vector.load %arg0[%c0, %c0_0] : memref<3x4xi8, #tpu.memory_space<vmem>>, vector<3x4xi8>
    %c0_1 = arith.constant 0 : index
    %c0_2 = arith.constant 0 : index
    %1 = vector.load %arg1[%c0_1, %c0_2] : memref<4x3xi8, #tpu.memory_space<vmem>>, vector<4x3xi8>
    %cst = arith.constant dense<0> : vector<3x3xi32>
    %2 = tpu.matmul %0, %1, %cst {dimension_numbers = #tpu.dot_dimension_numbers<[1], [0], [0], [1], [0, 0, 1, 1], [], []>} : vector<3x4xi8>, vector<4x3xi8>, vector<3x3xi32> -> vector<3x3xi32>
    %3 = arith.extsi %0 : vector<3x4xi8> to vector<3x4xi32>
    %4 = arith.extsi %1 : vector<4x3xi8> to vector<4x3xi32>
    %cst_3 = arith.constant dense<0> : vector<3xi32>
    %5 = vector.multi_reduction <add>, %3, %cst_3 [1] : vector<3x4xi32> to vector<3xi32>
    %6 = vector.shape_cast %5 : vector<3xi32> to vector<3x1xi32>
    %cst_4 = arith.constant dense<0> : vector<3xi32>
    %7 = vector.multi_reduction <add>, %4, %cst_4 [0] : vector<4x3xi32> to vector<3xi32>
    %8 = vector.shape_cast %7 : vector<3xi32> to vector<1x3xi32>
    %c18_i32 = arith.constant 18 : i32
    %9 = vector.broadcast %c18_i32 : i32 to vector<3x1xi32>
    %10 = arith.muli %9, %6 : vector<3x1xi32>
    %11 = vector.broadcast %10 : vector<3x1xi32> to vector<3x3xi32>
    %12 = arith.subi %2, %11 : vector<3x3xi32>
    %c-25_i32 = arith.constant -25 : i32
    %13 = vector.broadcast %c-25_i32 : i32 to vector<1x3xi32>
    %14 = arith.muli %13, %8 : vector<1x3xi32>
    %15 = vector.broadcast %14 : vector<1x3xi32> to vector<3x3xi32>
    %16 = arith.subi %12, %15 : vector<3x3xi32>
    %c-1800_i32 = arith.constant -1800 : i32
    %17 = vector.broadcast %c-1800_i32 : i32 to vector<3x3xi32>
    %18 = arith.addi %16, %17 : vector<3x3xi32>
    %19 = arith.sitofp %18 : vector<3x3xi32> to vector<3x3xf32>
    %cst_5 = arith.constant 3.784000e-04 : f32
    %20 = vector.broadcast %cst_5 : f32 to vector<3x3xf32>
    %21 = arith.mulf %19, %20 : vector<3x3xf32>
    %c0_6 = arith.constant 0 : index
    %c0_7 = arith.constant 0 : index
    %22 = vector.load %arg2[%c0_6, %c0_7] : memref<3x3xf32, #tpu.memory_space<vmem>>, vector<3x3xf32>
    tpu.vector_store %arg2[%c0_6, %c0_7], %21 {strides = array<i32>} : memref<3x3xf32, #tpu.memory_space<vmem>>, vector<3x3xf32>,
    return
  }
}

</mosaic_0001>

<llo_original>
// kernel: aten_mm_qint8.1
$region0: #{aten_mm_qint8.1}
  #allocation0 [shape = 'u32[]', space=smem, size = 0x4, offset = 0x4, fixed_abs, tag = 'smem constant byte address 0x4 - core index']
  #allocation1 [shape = 'u32[144,128]{1,0:T(1,128)}', space=vmem, size = 0x12000, scoped, tag = 'internal scratch']
  %s0 = inlined_call_operand.hbm [shape: s8[3,4], index: 0, kind: input, shape index: {}]
  %s1 = inlined_call_operand.vmem [shape: s8[4,3], index: 1, kind: input, shape index: {}]
  %s2 = inlined_call_operand.hbm [shape: f32[3,3], index: 2, kind: output, shape index: {}]
  %s3 = sld [smem:[#allocation0]]
  $region22: #{aten_mm_qint8.1} parent=0
    _
  %s5 = ssub.s32 1, %s3
  %s6 = scalar_select 0, %s5, %s3
  $region1: #{aten_mm_qint8.1} parent=0
    #allocation2 [shape = 'u8[512]{0}', space=vmem, size = 0x400, scoped, tag = 'input window, operand 0, single buffered']
    #allocation3 [shape = 's32[1]{0}', space=sflag, size = 0x4, scoped, tag = 'scoped memory for aten_mm_qint8.1']
    #allocation4 [shape = 's32[1]{0}', space=sflag, size = 0x4, scoped, tag = 'scoped memory for aten_mm_qint8.1']
    #allocation5 [shape = 'u8[2048]{0}', space=vmem, size = 0x800, scoped, tag = 'output window, operand 0, single buffered']
    %7 = vsyncpa [#allocation3], 0
    %8 = vsyncpa [#allocation4], 0
    // Predicated region
    $region2: #{aten_mm_qint8.1} parent=1 // pred_check
      _
    $region3: #{aten_mm_qint8.1} parent=1 // pred_check_branch
      %10 = sbr.rel (0) target = $region5
    $region4: #{aten_mm_qint8.1} parent=1 // pred_region
      %s12 = ssub.s32 16, 16
      %13 = vsyncadd [#allocation3], %s12
      %s15 = sshll.u32 [#allocation2], 4
      %s16 = int_to_ptr.vmem [resolvable:$true] %s15
      %18 = dma.hbm_to_vmem [thread:$0]  %s0, 16, %s16, [#allocation3]
    $region5: #{aten_mm_qint8.1} parent=1 // pred_fallthru
      _
    // Predicated region
    $region6: #{aten_mm_qint8.1} parent=1 // pred_check
      _
    $region7: #{aten_mm_qint8.1} parent=1 // pred_check_branch
      %20 = sbr.rel (0) target = $region9
    $region8: #{aten_mm_qint8.1} parent=1 // pred_region
      _
    $region9: #{aten_mm_qint8.1} parent=1 // pred_fallthru
      _
    // Predicated region
    $region10: #{aten_mm_qint8.1} parent=1 // pred_check
      _
    $region11: #{aten_mm_qint8.1} parent=1 // pred_check_branch
      %22 = sbr.rel (0) target = $region13
    $region12: #{aten_mm_qint8.1} parent=1 // pred_region
      %23 = dma.done [#allocation3], 16
    $region13: #{aten_mm_qint8.1} parent=1 // pred_fallthru
      _
    %v25 = vld [vmem:[#allocation2] sm:$0x1]
    %v26 = vld [vmem:[%s1] sm:$0x1]
    %vm27 = vcmask 31744
    %v29 = vsel %vm27, %v25, 0
    %vm31 = vcmask 1040384
    %v33 = vsel %vm31, %v26, 0
    %35 = vmatprep.subr.s8.mxu0 0
    %36 = vmatpush1.s8.msra.mxu0 0
    %37 = vmatprep.subr.s8.mxu0 0
    %38 = vmatpush1.s8.msra.mxu0 0
    %39 = vmatprep.subr.s8.mxu0 0
    %40 = vmatpush1.s8.msra.mxu0 0
    %41 = vmatprep.subr.s8.mxu0 0
    %42 = vmatpush1.s8.msra.mxu0 %v33
    %43 = vmatprep.subr.s8.mxu0 0
    %44 = vmatpush2.s8.msra.mxu0 0
    %45 = vmatprep.subr.s8.mxu0 0
    %46 = vmatpush2.s8.msra.mxu0 0
    %47 = vmatprep.subr.s8.mxu0 0
    %48 = vmatpush2.s8.msra.mxu0 0
    %49 = vmatprep.subr.s8.mxu0 0
    %50 = vmatpush2.s8.msra.mxu0 0
    %51 = vmatprep.mubr.s8.mxu0 0
    %52 = vmatmul.mubr.s8.gmra.mxu0 %v29
    %v53 = vpop.s32.mrf.mxu0
    %v54 = vadd.s32 0, %v53
    %v55 = vpop.s32.mrf.mxu0
    %v56 = vpop.s32.mrf.mxu0
    %v57 = vpop.s32.mrf.mxu0
    %v58 = vpop.s32.mrf.mxu0
    %v59 = vpop.s32.mrf.mxu0
    %v60 = vpop.s32.mrf.mxu0
    %v61 = vpop.s32.mrf.mxu0
    %62 = vdwg.mxu0
    %v63 = vunpack.c.0.s8 %v25
    %v64 = vunpack.c.0.s8 %v26
    %vm65 = vcmask 26624
    %v66 = vsel %vm65, %v63, 0
    %v67 = vand.u32 %v66, 65535
    %v68 = vshrl.u32 %v66, 16
    %v69 = vcvt.s32.f32 %v67
    %v70 = vcvt.s32.f32 %v68
    %71 = vadd.xlane.f32.xlu0 %v69
    %v72 = vpop.xlane.xlu0 %71
    %73 = vadd.xlane.f32.xlu0 %v70
    %v74 = vpop.xlane.xlu0 %73
    %v75 = vcvt.f32.s32 %v72
    %v76 = vcvt.f32.s32 %v74
    %v77 = vshll.u32 %v76, 16
    %v78 = vadd.s32 %v77, %v75
    %vm79 = vcmask 19456
    %v80 = vsel %vm79, %v64, 0
    %v81 = vrot.slane %v80, 4
    %v82 = vadd.s32 %v80, %v81
    %v83 = vrot.slane %v82, 2
    %v84 = vadd.s32 %v82, %v83
    %v85 = vrot.slane %v84, 1
    %v86 = vadd.s32 %v84, %v85
    %v87 = vmul.u32 %v78, 18
    %v88 = vsub.s32 %v54, %v87
    %v89 = vmul.u32 %v86, 4294967271
    %v90 = vsub.s32 %v88, %v89
    %v91 = vadd.s32 %v90, 4294965496
    %v92 = vcvt.s32.f32 %v91
    %v93 = vmul.f32 %v92, 0.0003784
    %vm94 = vcmask 18432
    %95 = vst.msk [vmem:[#allocation5] sm:$0x7] %vm94, %v93
    // Predicated region
    $region14: #{aten_mm_qint8.1} parent=1 // pred_check
      _
    $region15: #{aten_mm_qint8.1} parent=1 // pred_check_branch
      %97 = sbr.rel (0) target = $region17
    $region16: #{aten_mm_qint8.1} parent=1 // pred_region
      %s99 = ssub.s32 64, 64
      %100 = vsyncadd [#allocation4], %s99
      %s102 = sshll.u32 [#allocation5], 4
      %s103 = int_to_ptr.vmem [resolvable:$true] %s102
      %105 = dma.vmem_to_hbm [thread:$0]  %s103, 64, %s2, [#allocation4]
    $region17: #{aten_mm_qint8.1} parent=1 // pred_fallthru
      _
    // Predicated region
    $region18: #{aten_mm_qint8.1} parent=1 // pred_check
      _
    $region19: #{aten_mm_qint8.1} parent=1 // pred_check_branch
      %107 = sbr.rel (0) target = $region21
    $region20: #{aten_mm_qint8.1} parent=1 // pred_region
      %108 = dma.done [#allocation4], 64
    $region21: #{aten_mm_qint8.1} parent=1 // pred_fallthru
      _
    %109 = vsyncpa [#allocation3], 1
    %110 = vsyncpa [#allocation4], 1

</llo_original>
